<compile_context>
chip_gen: v5e
topology: v5e:2x2
jax: 0.10.0
libtpu: 0.0.40
codegen_flags: <defaults>
</compile_context>

<pallas_src>
import functools

import jax
import jax.numpy as jnp
from jax.experimental import pallas as pl
from jax.experimental.pallas import tpu as pltpu


def _attention_gate_kernel(g_ref, x_ref, wg_ref, wx_ref, b_ref, wp_ref, bp_ref,
                           out_ref):
    """One (batch, spatial-tile) block; channels on sublanes, spatial on lanes.

    g_ref:  (F_g, TM)      gating features (compute dtype)
    x_ref:  (F_l, TM)      skip-connection features (compute dtype)
    wg_ref: (F_int, F_g)   BN-folded W_g (transposed), compute dtype
    wx_ref: (F_int, F_l)   BN-folded W_x (transposed), compute dtype
    b_ref:  (F_int, 1)     BN-folded fused bias (bg + bx), f32
    wp_ref: (F_int, 1)     BN-folded psi weight, f32
    bp_ref: (1,)           BN-folded psi bias (SMEM scalar), f32
    out_ref:(F_l, TM)      x * sigmoid(psi)
    """
    g = g_ref[...]
    x = x_ref[...]

    # Two MXU pushes (no concat copy); f32 accumulation.
    h = (jnp.dot(wg_ref[...], g, preferred_element_type=jnp.float32) +
         jnp.dot(wx_ref[...], x, preferred_element_type=jnp.float32))
    h = jnp.maximum(h + b_ref[...], 0.0)                               # (F_int, TM)

    # psi projection (F_int -> 1): sublane reduction — cheap for small F_int.
    p = jnp.sum(h * wp_ref[...], axis=0, keepdims=True) + bp_ref[0]    # (1, TM)
    psi = jax.nn.sigmoid(p)

    # Gate the skip features; (1, TM) broadcasts over the F_l sublanes.
    out_ref[...] = (x.astype(jnp.float32) * psi).astype(out_ref.dtype)


def _fold_conv_bn(w, b, gamma, beta, mean, var, eps=1e-5):
    """Fold conv(1x1) bias + BatchNorm (eval mode) into a single (W', b')."""
    scale = gamma / jnp.sqrt(var + eps)                 # (F_out,)
    w_f = w * scale[None, :]                            # (F_in, F_out)
    b_f = b * scale + beta - mean * scale               # (F_out,)
    return w_f, b_f


def _round_up(v, m):
    return -(-v // m) * m


def _choose_tile_m(HW, F_g, F_l, F_int, in_bytes, out_bytes):
    """Channel-aware, 128-aligned spatial tile.  Returns (tm, needs_pad)."""
    # Per-lane VMEM cost per grid step: double-buffered I/O blocks (g, x, out)
    # plus f32 kernel intermediates (h, psi, small slack).
    per_lane = (2 * (F_g * in_bytes + F_l * in_bytes + F_l * out_bytes)
                + (F_int + 4) * 4)
    budget = 40 * (1 << 20)                    # stay well under v7x 64 MiB physical VMEM
    tm_cap = max(128, (budget // per_lane) // 128 * 128)
    tm_cap = min(tm_cap, 8192, _round_up(HW, 128))

    # Prefer >= 2 spatial tiles so the v7x megacore can shard across both TCs.
    if HW >= 256 and tm_cap >= HW:
        tm_cap = _round_up(-(-HW // 2), 128)

    # Prefer a tile that divides HW exactly — avoids wrapper-side pad/slice HBM passes.
    for tm in range(tm_cap, 127, -128):
        if HW % tm == 0:
            return tm, False
    # TODO(synk): ragged last tile could be handled with an in-kernel masked store
    # instead of padding; padding is the robust fallback (rare for pow-2 H, W).
    return tm_cap, True


def attention_gate(g, x, params, *, compute_dtype=None):
    """g, x: NCHW arrays.  Returns NCHW output = x * sigmoid(psi(g, x))."""
    N, F_g, H, W = g.shape
    _, F_l, _, _ = x.shape
    HW = H * W
    compute_dtype = compute_dtype or g.dtype
    out_dtype = x.dtype

    wg, bg = _fold_conv_bn(params["wg"], params["bg"], params["g_gamma"],
                           params["g_beta"], params["g_mean"], params["g_var"])
    wx, bx = _fold_conv_bn(params["wx"], params["bx"], params["x_gamma"],
                           params["x_beta"], params["x_mean"], params["x_var"])
    wp, bp = _fold_conv_bn(params["wp"], params["bp"], params["p_gamma"],
                           params["p_beta"], params["p_mean"], params["p_var"])
    F_int = wg.shape[1]

    # Separate, BN-folded projection weights (no fused concat weight).
    wg_t = wg.T.astype(compute_dtype)                   # (F_int, F_g)
    wx_t = wx.T.astype(compute_dtype)                   # (F_int, F_l)
    b_cat = (bg + bx).reshape(F_int, 1).astype(jnp.float32)
    wp2 = wp.reshape(F_int, 1).astype(jnp.float32)
    bp1 = bp.reshape(1,).astype(jnp.float32)

    # NCHW -> (N, C, H*W): pure reshape, no HBM transpose passes.
    g3 = g.astype(compute_dtype).reshape(N, F_g, HW)
    x3 = x.astype(compute_dtype).reshape(N, F_l, HW)

    in_bytes = jnp.dtype(compute_dtype).itemsize
    out_bytes = jnp.dtype(out_dtype).itemsize
    tm, needs_pad = _choose_tile_m(HW, F_g, F_l, F_int, in_bytes, out_bytes)

    hw_pad = _round_up(HW, tm)
    if needs_pad and hw_pad != HW:
        pad = hw_pad - HW
        g3 = jnp.pad(g3, ((0, 0), (0, 0), (0, pad)))
        x3 = jnp.pad(x3, ((0, 0), (0, 0), (0, pad)))

    grid = (N, hw_pad // tm)

    # VMEM budget: double-buffered I/O blocks + f32 intermediates, with headroom.
    needed = (2 * tm * (F_g * in_bytes + F_l * in_bytes + F_l * out_bytes)
              + tm * (F_int + 4) * 4)
    vmem_limit = int(min(max(needed * 2, 32 * (1 << 20)), 64 * (1 << 20)))

    cost = pl.CostEstimate(
        flops=2 * N * HW * F_int * (F_g + F_l),
        transcendentals=N * HW,
        bytes_accessed=N * HW * (F_g * in_bytes + F_l * in_bytes + F_l * out_bytes),
    )

    out3 = pl.pallas_call(
        _attention_gate_kernel,
        out_shape=jax.ShapeDtypeStruct((N, F_l, hw_pad), out_dtype),
        grid_spec=pltpu.PrefetchScalarGridSpec(
            num_scalar_prefetch=0,
            grid=grid,
            in_specs=[
                pl.BlockSpec((None, F_g, tm), lambda n, i: (n, 0, i)),     # g slab
                pl.BlockSpec((None, F_l, tm), lambda n, i: (n, 0, i)),     # x slab
                pl.BlockSpec((F_int, F_g), lambda n, i: (0, 0)),           # W_g^T
                pl.BlockSpec((F_int, F_l), lambda n, i: (0, 0)),           # W_x^T
                pl.BlockSpec((F_int, 1), lambda n, i: (0, 0)),             # fused bias
                pl.BlockSpec((F_int, 1), lambda n, i: (0, 0)),             # psi weight
                pl.BlockSpec(memory_space=pltpu.MemorySpace.SMEM),         # psi bias
            ],
            out_specs=pl.BlockSpec((None, F_l, tm), lambda n, i: (n, 0, i)),
        ),
        compiler_params=pltpu.CompilerParams(
            dimension_semantics=("parallel", "parallel"),
            vmem_limit_bytes=vmem_limit),
        cost_estimate=cost,
    )(g3, x3, wg_t, wx_t, b_cat, wp2, bp1)

    if hw_pad != HW:
        out3 = out3[:, :, :HW]
    return out3.reshape(N, F_l, H, W)


def _reference(g, x, params, eps=1e-5):
    """Plain-JAX reference matching PyTorch eval-mode forward."""
    def conv_bn(inp, w, b, gamma, beta, mean, var):
        y = jnp.einsum("nchw,cd->ndhw", inp, w) + b[None, :, None, None]
        scale = gamma / jnp.sqrt(var + eps)
        return (y * scale[None, :, None, None]
                + (beta - mean * scale)[None, :, None, None])

    g1 = conv_bn(g, params["wg"], params["bg"], params["g_gamma"],
                 params["g_beta"], params["g_mean"], params["g_var"])
    x1 = conv_bn(x, params["wx"], params["bx"], params["x_gamma"],
                 params["x_beta"], params["x_mean"], params["x_var"])
    h = jnp.maximum(g1 + x1, 0.0)
    p = conv_bn(h, params["wp"], params["bp"], params["p_gamma"],
                params["p_beta"], params["p_mean"], params["p_var"])
    psi = jax.nn.sigmoid(p)
    return x * psi


def make_params(key, F_g, F_l, F_int):
    ks = jax.random.split(key, 6)
    # TODO(synk): BatchNorm uses eval-mode running stats here; PyTorch default
    # training-mode batch statistics are not reproduced.
    return {
        # conv weights stored as (Cin, Cout) for 1x1 convs
        "wg": jax.random.normal(ks[0], (F_g, F_int), jnp.float32) * 0.1,
        "bg": jax.random.normal(ks[1], (F_int,), jnp.float32) * 0.1,
        "wx": jax.random.normal(ks[2], (F_l, F_int), jnp.float32) * 0.1,
        "bx": jax.random.normal(ks[3], (F_int,), jnp.float32) * 0.1,
        "wp": jax.random.normal(ks[4], (F_int, 1), jnp.float32) * 0.1,
        "bp": jax.random.normal(ks[5], (1,), jnp.float32) * 0.1,
        # BatchNorm params
        "g_gamma": jnp.linspace(0.9, 1.1, F_int, dtype=jnp.float32),
        "g_beta": jnp.linspace(-0.05, 0.05, F_int, dtype=jnp.float32),
        "g_mean": jnp.zeros((F_int,), jnp.float32),
        "g_var": jnp.ones((F_int,), jnp.float32),
        "x_gamma": jnp.linspace(1.1, 0.9, F_int, dtype=jnp.float32),
        "x_beta": jnp.linspace(0.05, -0.05, F_int, dtype=jnp.float32),
        "x_mean": jnp.zeros((F_int,), jnp.float32),
        "x_var": jnp.ones((F_int,), jnp.float32),
        "p_gamma": jnp.array([1.05], jnp.float32),
        "p_beta": jnp.array([-0.02], jnp.float32),
        "p_mean": jnp.zeros((1,), jnp.float32),
        "p_var": jnp.ones((1,), jnp.float32),
    }


if __name__ == "__main__":
    key = jax.random.PRNGKey(0)
    k_g, k_x, k_p = jax.random.split(key, 3)

    N, F_g, F_l, F_int, H, W = 2, 4, 4, 8, 16, 16
    g = jax.random.normal(k_g, (N, F_g, H, W), jnp.float32)
    x = jax.random.normal(k_x, (N, F_l, H, W), jnp.float32)
    params = make_params(k_p, F_g, F_l, F_int)

    out = attention_gate(g, x, params)
    out = jax.block_until_ready(out)

    ref = _reference(g, x, params)
    assert out.shape == (N, F_l, H, W)
    assert jnp.allclose(out, ref, atol=1e-5, rtol=1e-5), "mismatch vs reference"

    print("KERNEL_OK")
</pallas_src>

<mosaic_0001>
module attributes {stable_mosaic.version = 11 : i64} {
  func.func @_attention_gate_kernel(%arg0: i32, %arg1: i32, %arg2: memref<1x4x128xf32, #tpu.memory_space<vmem>>, %arg3: memref<1x4x128xf32, #tpu.memory_space<vmem>>, %arg4: memref<8x4xf32, #tpu.memory_space<vmem>>, %arg5: memref<8x4xf32, #tpu.memory_space<vmem>>, %arg6: memref<8x1xf32, #tpu.memory_space<vmem>>, %arg7: memref<8x1xf32, #tpu.memory_space<vmem>>, %arg8: memref<1xf32, #tpu.memory_space<smem>>, %arg9: memref<1x4x128xf32, #tpu.memory_space<vmem>>) attributes {dimension_semantics = [#tpu.dimension_semantics<parallel>, #tpu.dimension_semantics<parallel>], iteration_bounds = array<i64: 2, 2>, scalar_prefetch = 0 : i64, scratch_operands = 0 : i64, tpu.core_type = #tpu.core_type<tc>, window_params = [{transform_indices = @transform_0, window_bounds = array<i64: 1, 4, 128>}, {transform_indices = @transform_1, window_bounds = array<i64: 1, 4, 128>}, {pipeline_mode = #tpu.pipeline_mode<synchronous>, transform_indices = @transform_2, window_bounds = array<i64: 8, 4>}, {pipeline_mode = #tpu.pipeline_mode<synchronous>, transform_indices = @transform_3, window_bounds = array<i64: 8, 4>}, {pipeline_mode = #tpu.pipeline_mode<synchronous>, transform_indices = @transform_4, window_bounds = array<i64: 8, 1>}, {pipeline_mode = #tpu.pipeline_mode<synchronous>, transform_indices = @transform_5, window_bounds = array<i64: 8, 1>}, {transform_indices = @transform_6, window_bounds = array<i64: 1>}, {transform_indices = @transform_7, window_bounds = array<i64: 1, 4, 128>}]} {
    %c0 = arith.constant 0 : index
    %c0_0 = arith.constant 0 : index
    %c0_1 = arith.constant 0 : index
    %0 = vector.load %arg2[%c0, %c0_0, %c0_1] : memref<1x4x128xf32, #tpu.memory_space<vmem>>, vector<1x4x128xf32>
    %1 = vector.shape_cast %0 : vector<1x4x128xf32> to vector<4x128xf32>
    %c0_2 = arith.constant 0 : index
    %c0_3 = arith.constant 0 : index
    %c0_4 = arith.constant 0 : index
    %2 = vector.load %arg3[%c0_2, %c0_3, %c0_4] : memref<1x4x128xf32, #tpu.memory_space<vmem>>, vector<1x4x128xf32>
    %3 = vector.shape_cast %2 : vector<1x4x128xf32> to vector<4x128xf32>
    %c0_5 = arith.constant 0 : index
    %c0_6 = arith.constant 0 : index
    %4 = vector.load %arg4[%c0_5, %c0_6] : memref<8x4xf32, #tpu.memory_space<vmem>>, vector<8x4xf32>
    %cst = arith.constant dense<0.000000e+00> : vector<8x128xf32>
    %5 = tpu.matmul %4, %1, %cst {dimension_numbers = #tpu.dot_dimension_numbers<[1], [0], [0], [1], [0, 0, 1, 1], [], []>} : vector<8x4xf32>, vector<4x128xf32>, vector<8x128xf32> -> vector<8x128xf32>
    %c0_7 = arith.constant 0 : index
    %c0_8 = arith.constant 0 : index
    %6 = vector.load %arg5[%c0_7, %c0_8] : memref<8x4xf32, #tpu.memory_space<vmem>>, vector<8x4xf32>
    %cst_9 = arith.constant dense<0.000000e+00> : vector<8x128xf32>
    %7 = tpu.matmul %6, %3, %cst_9 {dimension_numbers = #tpu.dot_dimension_numbers<[1], [0], [0], [1], [0, 0, 1, 1], [], []>} : vector<8x4xf32>, vector<4x128xf32>, vector<8x128xf32> -> vector<8x128xf32>
    %8 = arith.addf %5, %7 : vector<8x128xf32>
    %c0_10 = arith.constant 0 : index
    %c0_11 = arith.constant 0 : index
    %9 = vector.load %arg6[%c0_10, %c0_11] : memref<8x1xf32, #tpu.memory_space<vmem>>, vector<8x1xf32>
    %10 = vector.broadcast %9 : vector<8x1xf32> to vector<8x128xf32>
    %11 = arith.addf %8, %10 : vector<8x128xf32>
    %cst_12 = arith.constant 0.000000e+00 : f32
    %12 = vector.broadcast %cst_12 : f32 to vector<8x128xf32>
    %13 = arith.maximumf %11, %12 : vector<8x128xf32>
    %c0_13 = arith.constant 0 : index
    %c0_14 = arith.constant 0 : index
    %14 = vector.load %arg7[%c0_13, %c0_14] : memref<8x1xf32, #tpu.memory_space<vmem>>, vector<8x1xf32>
    %15 = vector.broadcast %14 : vector<8x1xf32> to vector<8x128xf32>
    %16 = arith.mulf %13, %15 : vector<8x128xf32>
    %cst_15 = arith.constant dense<0.000000e+00> : vector<128xf32>
    %17 = vector.multi_reduction <add>, %16, %cst_15 [0] : vector<8x128xf32> to vector<128xf32>
    %18 = vector.shape_cast %17 : vector<128xf32> to vector<1x128xf32>
    %c0_16 = arith.constant 0 : index
    %19 = memref.load %arg8[%c0_16] : memref<1xf32, #tpu.memory_space<smem>>
    %20 = vector.broadcast %19 : f32 to vector<1x128xf32>
    %21 = arith.addf %18, %20 : vector<1x128xf32>
    %22 = arith.negf %21 : vector<1x128xf32>
    %23 = math.exp %22 : vector<1x128xf32>
    %cst_17 = arith.constant 1.000000e+00 : f32
    %24 = vector.broadcast %cst_17 : f32 to vector<1x128xf32>
    %25 = arith.addf %24, %23 : vector<1x128xf32>
    %26 = arith.divf %24, %25 : vector<1x128xf32>
    %27 = vector.broadcast %26 : vector<1x128xf32> to vector<4x128xf32>
    %28 = arith.mulf %3, %27 : vector<4x128xf32>
    %c0_18 = arith.constant 0 : index
    %c0_19 = arith.constant 0 : index
    %c0_20 = arith.constant 0 : index
    %29 = vector.load %arg9[%c0_18, %c0_19, %c0_20] : memref<1x4x128xf32, #tpu.memory_space<vmem>>, vector<1x4x128xf32>
    %30 = vector.shape_cast %29 : vector<1x4x128xf32> to vector<4x128xf32>
    %31 = vector.shape_cast %28 : vector<4x128xf32> to vector<1x4x128xf32>
    tpu.vector_store %arg9[%c0_18, %c0_19, %c0_20], %31 {strides = array<i32>} : memref<1x4x128xf32, #tpu.memory_space<vmem>>, vector<1x4x128xf32>,
    return
  }
  func.func @transform_0(%arg0: i32, %arg1: i32) -> (i32, i32, i32) {
    %c0_i32 = arith.constant 0 : i32
    %c0_i32_0 = arith.constant 0 : i32
    return %arg0, %c0_i32, %arg1 : i32, i32, i32
  }
  func.func @transform_1(%arg0: i32, %arg1: i32) -> (i32, i32, i32) {
    %c0_i32 = arith.constant 0 : i32
    %c0_i32_0 = arith.constant 0 : i32
    return %arg0, %c0_i32, %arg1 : i32, i32, i32
  }
  func.func @transform_2(%arg0: i32, %arg1: i32) -> (i32, i32) {
    %c0_i32 = arith.constant 0 : i32
    %c0_i32_0 = arith.constant 0 : i32
    %c0_i32_1 = arith.constant 0 : i32
    return %c0_i32, %c0_i32_0 : i32, i32
  }
  func.func @transform_3(%arg0: i32, %arg1: i32) -> (i32, i32) {
    %c0_i32 = arith.constant 0 : i32
    %c0_i32_0 = arith.constant 0 : i32
    %c0_i32_1 = arith.constant 0 : i32
    return %c0_i32, %c0_i32_0 : i32, i32
  }
  func.func @transform_4(%arg0: i32, %arg1: i32) -> (i32, i32) {
    %c0_i32 = arith.constant 0 : i32
    %c0_i32_0 = arith.constant 0 : i32
    %c0_i32_1 = arith.constant 0 : i32
    return %c0_i32, %c0_i32_0 : i32, i32
  }
  func.func @transform_5(%arg0: i32, %arg1: i32) -> (i32, i32) {
    %c0_i32 = arith.constant 0 : i32
    %c0_i32_0 = arith.constant 0 : i32
    %c0_i32_1 = arith.constant 0 : i32
    return %c0_i32, %c0_i32_0 : i32, i32
  }
  func.func @transform_6(%arg0: i32, %arg1: i32) -> i32 {
    %c0_i32 = arith.constant 0 : i32
    %c0_i32_0 = arith.constant 0 : i32
    return %c0_i32 : i32
  }
  func.func @transform_7(%arg0: i32, %arg1: i32) -> (i32, i32, i32) {
    %c0_i32 = arith.constant 0 : i32
    %c0_i32_0 = arith.constant 0 : i32
    return %arg0, %c0_i32, %arg1 : i32, i32, i32
  }
}

</mosaic_0001>

<llo_original>
// kernel: tpu_custom_call.1
$region0: #{tpu_custom_call.1}
  #allocation0 [shape = 'u32[]', space=smem, size = 0x4, offset = 0x4, fixed_abs, tag = 'smem constant byte address 0x4 - core index']
  #allocation1 [shape = 'u32[72,128]{1,0:T(1,128)}', space=vmem, size = 0x9000, scoped, tag = 'internal scratch']
  #allocation2 [shape = 'f32[1]{0:T(128)S(6)}', space=smem, size = 0x200, scoped, tag = 'scoped memory for tpu_custom_call.1']
  %s0 = inlined_call_operand.vmem [shape: f32[2,4,256], index: 0, kind: input, shape index: {}]
  %s1 = inlined_call_operand.vmem [shape: f32[2,4,256], index: 1, kind: input, shape index: {}]
  %s2 = inlined_call_operand.vmem [shape: f32[8,4], index: 2, kind: input, shape index: {}]
  %s3 = inlined_call_operand.vmem [shape: f32[8,4], index: 3, kind: input, shape index: {}]
  %s4 = inlined_call_operand.vmem [shape: f32[8,1], index: 4, kind: input, shape index: {}]
  %s5 = inlined_call_operand.vmem [shape: f32[8,1], index: 5, kind: input, shape index: {}]
  %s6 = inlined_call_operand.<no memory space> [shape: f32[1], index: 6, kind: input, shape index: {}]
  %s7 = inlined_call_operand.hbm [shape: f32[2,4,256], index: 7, kind: output, shape index: {}]
  %s8 = sld [smem:[#allocation0]]
  $region61: #{tpu_custom_call.1} parent=0
    _
  %s10 = ssub.s32 1, %s8
  %s11 = scalar_select 0, %s10, %s8
  %12 = sst [smem:[#allocation2]] %s6
  $region1: #{tpu_custom_call.1} parent=0
    #allocation3 [shape = 'u8[4096]{0}', space=vmem, size = 0x1000, scoped, tag = 'output window, operand 0']
    #allocation4 [shape = 's32[2]{0}', space=sflag, size = 0x8, scoped, tag = 'scoped memory for tpu_custom_call.1']
    %13 = vsyncpa [#allocation4], 0
    %s14 = scalar_lea.sflag [#allocation4], 1
    %15 = vsyncpa %s14, 0
    loop: start=0, step=1, limit=6
    $region2: #{tpu_custom_call.1} parent=1 // loop_pre_header
      _
    $region3: #{tpu_custom_call.1} parent=1 // loop_header
      %s17 = sphi 0, %s21
      %p18 = scmp.ge.s32.totalorder %s17, 6
      %s24 = sphi 0, %s36
      %s25 = sphi 0, %s32
      %s26 = sphi 0, %s24
      %s27 = sphi 0, %s25
      %s28 = sphi 0, %s26
      %s29 = sphi 0, %s27
      %s41 = sphi 0, %s43
      %s44 = sphi 0, %s41
      %s45 = sphi 0, %s44
      %s61 = sphi 0, %s45
      %s69 = sphi 0, %s71
      %s72 = sphi 0, %s69
      %s73 = sphi 0, %s72
      %s89 = sphi 0, %s73
      %s93 = sphi 0, %s93
      %s95 = sphi 0, %s93
      %s96 = sphi 0, %s95
      %s110 = sphi 0, %s96
      %s114 = sphi 0, %s114
      %s116 = sphi 0, %s114
      %s117 = sphi 0, %s116
      %s131 = sphi 0, %s117
      %s135 = sphi 0, %s135
      %s137 = sphi 0, %s135
      %s138 = sphi 0, %s137
      %s152 = sphi 0, %s138
      %s156 = sphi 0, %s156
      %s158 = sphi 0, %s156
      %s159 = sphi 0, %s158
      %s173 = sphi 0, %s159
      %s177 = sphi 0, %s177
      %s179 = sphi 0, %s177
      %s180 = sphi 0, %s179
      %s194 = sphi 0, %s180
      %s202 = sphi 0, %s204
      %s205 = sphi 0, %s202
      %s206 = sphi 0, %s205
      %s222 = sphi 0, %s206
    $region4: #{tpu_custom_call.1} parent=1 // loop_header_branch
      %20 = sbr.rel (%p18) target = $region8
    $region5: #{tpu_custom_call.1} parent=1 // loop_body
      %s22 = ssub.s32 %s17, 1
      %s23 = ssub.s32 %s17, 2
      %s30 = sadd.s32 1, %s25
      %p31 = scmp.ge.s32.totalorder %s30, 2
      %s32 = scalar_select %p31, 0, %s30
      %s33 = sadd.s32 1, %s24
      %s34 = scalar_select %p31, %s33, %s24
      %p35 = scmp.ge.s32.totalorder %s34, 2
      %s36 = scalar_select %p35, 0, %s34
      %s37 = ssub.s32 %s24, %s36
      %s38 = ssub.s32 %s25, %s32
      %s39 = sor.u32 %s37, %s38
      %p40 = scmp.eq.s32.totalorder %s39, 0
      %s42 = sadd.s32 %s41, 1
      %s43 = scalar_select %p40, %s41, %s42
      %p46 = pneg %p40
      %p47 = scmp.eq.s32.totalorder %s17, 3
      %p48 = por %p46, %p47
      %p49 = scmp.ne.s32.totalorder %s41, %s44
      %p50 = scmp.eq.s32.totalorder %s17, 0
      %p51 = por %p49, %p50
      %p52 = scmp.ne.s32.totalorder %s41, %s44
      %p53 = scmp.eq.s32.totalorder %s22, 3
      %p54 = por %p52, %p53
      %p55 = scmp.ne.s32.totalorder %s44, %s45
      %p56 = scmp.eq.s32.totalorder %s22, 0
      %p57 = por %p55, %p56
      %p58 = scmp.ne.s32.totalorder %s44, %s45
      %p59 = scmp.eq.s32.totalorder %s23, 3
      %p60 = por %p58, %p59
      %p62 = scmp.ne.s32.totalorder %s45, %s61
      %p63 = scmp.eq.s32.totalorder %s23, 0
      %p64 = por %p62, %p63
      %s65 = ssub.s32 %s24, %s36
      %s66 = ssub.s32 %s25, %s32
      %s67 = sor.u32 %s65, %s66
      %p68 = scmp.eq.s32.totalorder %s67, 0
      %s70 = sadd.s32 %s69, 1
      %s71 = scalar_select %p68, %s69, %s70
      %p74 = pneg %p68
      %p75 = scmp.eq.s32.totalorder %s17, 3
      %p76 = por %p74, %p75
      %p77 = scmp.ne.s32.totalorder %s69, %s72
      %p78 = scmp.eq.s32.totalorder %s17, 0
      %p79 = por %p77, %p78
      %p80 = scmp.ne.s32.totalorder %s69, %s72
      %p81 = scmp.eq.s32.totalorder %s22, 3
      %p82 = por %p80, %p81
      %p83 = scmp.ne.s32.totalorder %s72, %s73
      %p84 = scmp.eq.s32.totalorder %s22, 0
      %p85 = por %p83, %p84
      %p86 = scmp.ne.s32.totalorder %s72, %s73
      %p87 = scmp.eq.s32.totalorder %s23, 3
      %p88 = por %p86, %p87
      %p90 = scmp.ne.s32.totalorder %s73, %s89
      %p91 = scmp.eq.s32.totalorder %s23, 0
      %p92 = por %p90, %p91
      %s94 = sadd.s32 %s93, 1
      %p97 = scmp.eq.s32.totalorder %s17, 3
      %p98 = scmp.ne.s32.totalorder %s93, %s95
      %p99 = scmp.eq.s32.totalorder %s17, 0
      %p100 = por %p98, %p99
      %p101 = scmp.ne.s32.totalorder %s93, %s95
      %p102 = scmp.eq.s32.totalorder %s22, 3
      %p103 = por %p101, %p102
      %p104 = scmp.ne.s32.totalorder %s95, %s96
      %p105 = scmp.eq.s32.totalorder %s22, 0
      %p106 = por %p104, %p105
      %p107 = scmp.ne.s32.totalorder %s95, %s96
      %p108 = scmp.eq.s32.totalorder %s23, 3
      %p109 = por %p107, %p108
      %p111 = scmp.ne.s32.totalorder %s96, %s110
      %p112 = scmp.eq.s32.totalorder %s23, 0
      %p113 = por %p111, %p112
      %s115 = sadd.s32 %s114, 1
      %p118 = scmp.eq.s32.totalorder %s17, 3
      %p119 = scmp.ne.s32.totalorder %s114, %s116
      %p120 = scmp.eq.s32.totalorder %s17, 0
      %p121 = por %p119, %p120
      %p122 = scmp.ne.s32.totalorder %s114, %s116
      %p123 = scmp.eq.s32.totalorder %s22, 3
      %p124 = por %p122, %p123
      %p125 = scmp.ne.s32.totalorder %s116, %s117
      %p126 = scmp.eq.s32.totalorder %s22, 0
      %p127 = por %p125, %p126
      %p128 = scmp.ne.s32.totalorder %s116, %s117
      %p129 = scmp.eq.s32.totalorder %s23, 3
      %p130 = por %p128, %p129
      %p132 = scmp.ne.s32.totalorder %s117, %s131
      %p133 = scmp.eq.s32.totalorder %s23, 0
      %p134 = por %p132, %p133
      %s136 = sadd.s32 %s135, 1
      %p139 = scmp.eq.s32.totalorder %s17, 3
      %p140 = scmp.ne.s32.totalorder %s135, %s137
      %p141 = scmp.eq.s32.totalorder %s17, 0
      %p142 = por %p140, %p141
      %p143 = scmp.ne.s32.totalorder %s135, %s137
      %p144 = scmp.eq.s32.totalorder %s22, 3
      %p145 = por %p143, %p144
      %p146 = scmp.ne.s32.totalorder %s137, %s138
      %p147 = scmp.eq.s32.totalorder %s22, 0
      %p148 = por %p146, %p147
      %p149 = scmp.ne.s32.totalorder %s137, %s138
      %p150 = scmp.eq.s32.totalorder %s23, 3
      %p151 = por %p149, %p150
      %p153 = scmp.ne.s32.totalorder %s138, %s152
      %p154 = scmp.eq.s32.totalorder %s23, 0
      %p155 = por %p153, %p154
      %s157 = sadd.s32 %s156, 1
      %p160 = scmp.eq.s32.totalorder %s17, 3
      %p161 = scmp.ne.s32.totalorder %s156, %s158
      %p162 = scmp.eq.s32.totalorder %s17, 0
      %p163 = por %p161, %p162
      %p164 = scmp.ne.s32.totalorder %s156, %s158
      %p165 = scmp.eq.s32.totalorder %s22, 3
      %p166 = por %p164, %p165
      %p167 = scmp.ne.s32.totalorder %s158, %s159
      %p168 = scmp.eq.s32.totalorder %s22, 0
      %p169 = por %p167, %p168
      %p170 = scmp.ne.s32.totalorder %s158, %s159
      %p171 = scmp.eq.s32.totalorder %s23, 3
      %p172 = por %p170, %p171
      %p174 = scmp.ne.s32.totalorder %s159, %s173
      %p175 = scmp.eq.s32.totalorder %s23, 0
      %p176 = por %p174, %p175
      %s178 = sadd.s32 %s177, 1
      %p181 = scmp.eq.s32.totalorder %s17, 3
      %p182 = scmp.ne.s32.totalorder %s177, %s179
      %p183 = scmp.eq.s32.totalorder %s17, 0
      %p184 = por %p182, %p183
      %p185 = scmp.ne.s32.totalorder %s177, %s179
      %p186 = scmp.eq.s32.totalorder %s22, 3
      %p187 = por %p185, %p186
      %p188 = scmp.ne.s32.totalorder %s179, %s180
      %p189 = scmp.eq.s32.totalorder %s22, 0
      %p190 = por %p188, %p189
      %p191 = scmp.ne.s32.totalorder %s179, %s180
      %p192 = scmp.eq.s32.totalorder %s23, 3
      %p193 = por %p191, %p192
      %p195 = scmp.ne.s32.totalorder %s180, %s194
      %p196 = scmp.eq.s32.totalorder %s23, 0
      %p197 = por %p195, %p196
      %s198 = ssub.s32 %s24, %s36
      %s199 = ssub.s32 %s25, %s32
      %s200 = sor.u32 %s198, %s199
      %p201 = scmp.eq.s32.totalorder %s200, 0
      %s203 = sadd.s32 %s202, 1
      %s204 = scalar_select %p201, %s202, %s203
      %p207 = pneg %p201
      %p208 = scmp.eq.s32.totalorder %s17, 3
      %p209 = por %p207, %p208
      %p210 = scmp.ne.s32.totalorder %s202, %s205
      %p211 = scmp.eq.s32.totalorder %s17, 0
      %p212 = por %p210, %p211
      %p213 = scmp.ne.s32.totalorder %s202, %s205
      %p214 = scmp.eq.s32.totalorder %s22, 3
      %p215 = por %p213, %p214
      %p216 = scmp.ne.s32.totalorder %s205, %s206
      %p217 = scmp.eq.s32.totalorder %s22, 0
      %p218 = por %p216, %p217
      %p219 = scmp.ne.s32.totalorder %s205, %s206
      %p220 = scmp.eq.s32.totalorder %s23, 3
      %p221 = por %p219, %p220
      %p223 = scmp.ne.s32.totalorder %s206, %s222
      %p224 = scmp.eq.s32.totalorder %s23, 0
      %p225 = por %p223, %p224
      %p226 = scmp.le.s32.totalorder 1, %s17
      %p227 = scmp.lt.s32.totalorder %s17, 5
      %p228 = pnand %p226, %p227
      %p229 = pneg %p228
      // Predicated region
      $region9: #{tpu_custom_call.1} parent=5 // pred_check
        _
      $region10: #{tpu_custom_call.1} parent=5 // pred_check_branch
        %231 = sbr.rel (%p228) target = $region12
      $region11: #{tpu_custom_call.1} parent=5 // pred_region
        %s232 = ssub.s32 %s17, 1
        // Predicated region
        $region13: #{tpu_custom_call.1} parent=11 // pred_check
          %p233 = pneg %p106
        $region14: #{tpu_custom_call.1} parent=11 // pred_check_branch
          %235 = sbr.rel (%p233) target = $region16
        $region15: #{tpu_custom_call.1} parent=11 // pred_region
          _
        $region16: #{tpu_custom_call.1} parent=11 // pred_fallthru
          _
        // Predicated region
        $region17: #{tpu_custom_call.1} parent=11 // pred_check
          %p236 = pneg %p127
        $region18: #{tpu_custom_call.1} parent=11 // pred_check_branch
          %238 = sbr.rel (%p236) target = $region20
        $region19: #{tpu_custom_call.1} parent=11 // pred_region
          _
        $region20: #{tpu_custom_call.1} parent=11 // pred_fallthru
          _
        // Predicated region
        $region21: #{tpu_custom_call.1} parent=11 // pred_check
          %p239 = pneg %p148
        $region22: #{tpu_custom_call.1} parent=11 // pred_check_branch
          %241 = sbr.rel (%p239) target = $region24
        $region23: #{tpu_custom_call.1} parent=11 // pred_region
          _
        $region24: #{tpu_custom_call.1} parent=11 // pred_fallthru
          _
        // Predicated region
        $region25: #{tpu_custom_call.1} parent=11 // pred_check
          %p242 = pneg %p169
        $region26: #{tpu_custom_call.1} parent=11 // pred_check_branch
          %244 = sbr.rel (%p242) target = $region28
        $region27: #{tpu_custom_call.1} parent=11 // pred_region
          _
        $region28: #{tpu_custom_call.1} parent=11 // pred_fallthru
          _
        // Predicated region
        $region29: #{tpu_custom_call.1} parent=11 // pred_check
          %p245 = pneg %p190
        $region30: #{tpu_custom_call.1} parent=11 // pred_check_branch
          %247 = sbr.rel (%p245) target = $region32
        $region31: #{tpu_custom_call.1} parent=11 // pred_region
          _
        $region32: #{tpu_custom_call.1} parent=11 // pred_fallthru
          _
      $region12: #{tpu_custom_call.1} parent=5 // pred_fallthru
        _
      %p248 = scmp.lt.s32.totalorder %s17, 4
      // Predicated region
      $region33: #{tpu_custom_call.1} parent=5 // pred_check
        %p249 = pneg %p248
      $region34: #{tpu_custom_call.1} parent=5 // pred_check_branch
        %251 = sbr.rel (%p249) target = $region36
      $region35: #{tpu_custom_call.1} parent=5 // pred_region
        // Predicated region
        $region37: #{tpu_custom_call.1} parent=35 // pred_check
          %p252 = pneg %p51
        $region38: #{tpu_custom_call.1} parent=35 // pred_check_branch
          %254 = sbr.rel (%p252) target = $region40
        $region39: #{tpu_custom_call.1} parent=35 // pred_region
          %p255 = scmp.lt.s32.totalorder %s24, 1
          %s256 = scalar_select %p255, %s24, 1
          %p257 = scmp.lt.s32.totalorder %s25, 1
          %s258 = scalar_select %p257, %s25, 1
          %s259 = smul.addr %s256, 2
          %s260 = sadd.s32 %s258, %s259
          %s261 = smul.addr %s260, 4
          %s262 = scalar_lea.vmem %s0, %s261
        $region40: #{tpu_custom_call.1} parent=35 // pred_fallthru
          _
        // Predicated region
        $region41: #{tpu_custom_call.1} parent=35 // pred_check
          %p263 = pneg %p79
        $region42: #{tpu_custom_call.1} parent=35 // pred_check_branch
          %265 = sbr.rel (%p263) target = $region44
        $region43: #{tpu_custom_call.1} parent=35 // pred_region
          %p266 = scmp.lt.s32.totalorder %s24, 1
          %s267 = scalar_select %p266, %s24, 1
          %p268 = scmp.lt.s32.totalorder %s25, 1
          %s269 = scalar_select %p268, %s25, 1
          %s270 = smul.addr %s267, 2
          %s271 = sadd.s32 %s269, %s270
          %s272 = smul.addr %s271, 4
          %s273 = scalar_lea.vmem %s1, %s272
        $region44: #{tpu_custom_call.1} parent=35 // pred_fallthru
          _
      $region36: #{tpu_custom_call.1} parent=5 // pred_fallthru
        _
      %p274 = scmp.le.s32.totalorder 1, %s17
      %p275 = scmp.lt.s32.totalorder %s17, 5
      %p276 = pnand %p274, %p275
      %p277 = pneg %p276
      // Predicated region
      $region45: #{tpu_custom_call.1} parent=5 // pred_check
        _
      $region46: #{tpu_custom_call.1} parent=5 // pred_check_branch
        %279 = sbr.rel (%p276) target = $region48
      $region47: #{tpu_custom_call.1} parent=5 // pred_region
        %s280 = ssub.s32 %s17, 1
        %p281 = scmp.lt.s32.totalorder %s26, 1
        %s282 = scalar_select %p281, %s26, 1
        %p283 = scmp.lt.s32.totalorder %s27, 1
        %s284 = scalar_select %p283, %s27, 1
        %s285 = smul.addr %s282, 2
        %s286 = sadd.s32 %s284, %s285
        %s287 = smul.addr %s286, 4
        %s288 = scalar_lea.vmem %s0, %s287
        %p289 = pneg %p57
        %p290 = pneg %p54
        %p291 = scmp.lt.s32.totalorder %s26, 1
        %s292 = scalar_select %p291, %s26, 1
        %p293 = scmp.lt.s32.totalorder %s27, 1
        %s294 = scalar_select %p293, %s27, 1
        %s295 = smul.addr %s292, 2
        %s296 = sadd.s32 %s294, %s295
        %s297 = smul.addr %s296, 4
        %s298 = scalar_lea.vmem %s1, %s297
        %p299 = pneg %p85
        %p300 = pneg %p82
        %p301 = pneg %p106
        %p302 = pneg %p103
        %p303 = pneg %p127
        %p304 = pneg %p124
        %p305 = pneg %p148
        %p306 = pneg %p145
        %p307 = pneg %p169
        %p308 = pneg %p166
        %p309 = pneg %p190
        %p310 = pneg %p187
        %p311 = pneg %p218
        %p312 = pneg %p215
        %s313 = sand.u32 %s205, 1
        %s314 = scalar_lea.sflag [#allocation4], %s313
        %s315 = sand.u32 %s205, 1
        %s316 = smul.addr %s315, 4
        %s317 = scalar_lea.vmem [#allocation3], %s316
        %p318 = scmp.lt.s32.totalorder %s26, 1
        %s319 = scalar_select %p318, %s26, 1
        %p320 = scmp.lt.s32.totalorder %s27, 1
        %s321 = scalar_select %p320, %s27, 1
        %s322 = smul.addr %s319, 2
        %s323 = sadd.s32 %s321, %s322
        %s324 = smul.addr %s323, 4
        %s325 = scalar_lea.vmem %s0, %s324
        %p326 = scmp.lt.s32.totalorder %s26, 1
        %s327 = scalar_select %p326, %s26, 1
        %p328 = scmp.lt.s32.totalorder %s27, 1
        %s329 = scalar_select %p328, %s27, 1
        %s330 = smul.addr %s327, 2
        %s331 = sadd.s32 %s329, %s330
        %s332 = smul.addr %s331, 4
        %s333 = scalar_lea.vmem %s1, %s332
        %v334 = vld [vmem:[%s325] sm:$0xf]
        %v335 = vld [vmem:[%s333] sm:$0xf]
        %v336 = vld [vmem:[%s2] sm:$0xff]
        %v337 = vld [vmem:[%s3] sm:$0xff]
        %vm338 = vcmask 31744
        %v340 = vsel %vm338, %v337, 0
        %vm342 = vcmask 1043456
        %v344 = vsel %vm342, %v335, 0
        %346 = vmatpush.msra.mxu0 0.0
        %347 = vmatpush.msra.mxu0 0.0
        %348 = vmatpush.msra.mxu0 0.0
        %349 = vmatpush.msra.mxu0 0.0
        %350 = vmatpush.msra.mxu0 0.0
        %351 = vmatpush.msra.mxu0 0.0
        %352 = vmatpush.msra.mxu0 0.0
        %353 = vmatpush.msra.mxu0 0.0
        %354 = vmatpush.msra.mxu0 0.0
        %355 = vmatpush.msra.mxu0 0.0
        %356 = vmatpush.msra.mxu0 0.0
        %357 = vmatpush.msra.mxu0 0.0
        %358 = vmatpush.msra.mxu0 0.0
        %359 = vmatpush.msra.mxu0 0.0
        %360 = vmatpush.msra.mxu0 0.0
        %361 = vmatpush.msra.mxu0 %v344
        %362 = vmatmul.f32.gmra.mxu0 %v340
        %v363 = vpop.f32.mrf.mxu0
        %v364 = vadd.f32 0.0, %v363
        %365 = vdwg.mxu0
        %v367 = vsel %vm338, %v336, 0
        %v370 = vsel %vm342, %v334, 0
        %372 = vmatpush.msra.mxu0 0.0
        %373 = vmatpush.msra.mxu0 0.0
        %374 = vmatpush.msra.mxu0 0.0
        %375 = vmatpush.msra.mxu0 0.0
        %376 = vmatpush.msra.mxu0 0.0
        %377 = vmatpush.msra.mxu0 0.0
        %378 = vmatpush.msra.mxu0 0.0
        %379 = vmatpush.msra.mxu0 0.0
        %380 = vmatpush.msra.mxu0 0.0
        %381 = vmatpush.msra.mxu0 0.0
        %382 = vmatpush.msra.mxu0 0.0
        %383 = vmatpush.msra.mxu0 0.0
        %384 = vmatpush.msra.mxu0 0.0
        %385 = vmatpush.msra.mxu0 0.0
        %386 = vmatpush.msra.mxu0 0.0
        %387 = vmatpush.msra.mxu0 %v370
        %388 = vmatmul.f32.gmra.mxu0 %v367
        %v389 = vpop.f32.mrf.mxu0
        %v390 = vadd.f32 %v364, %v389
        %391 = vdwg.mxu0
        %v392 = vld [vmem:[%s4] sm:$0xff]
        %394 = vset.pattern.permute.xlu0 0
        %395 = vperm.xlu0 %394, %v392
        %v396 = vpop.permute.xlu0 %395
        %v398 = vadd.f32 %v390, %v396
        %v399 = vmax.f32 %v398, 0.0
        %v400 = vld [vmem:[%s5] sm:$0xff]
        %402 = vset.pattern.permute.xlu0 0
        %403 = vperm.xlu0 %402, %v400
        %v404 = vpop.permute.xlu0 %403
        %v406 = vmul.f32 %v399, %v404
        %v407 = vrot.slane %v406, 4
        %v408 = vadd.f32 %v406, %v407
        %v409 = vrot.slane %v408, 2
        %v410 = vadd.f32 %v408, %v409
        %v411 = vrot.slane %v410, 1
        %v412 = vadd.f32 %v410, %v411
        %s413 = sld [smem:[#allocation2]]
        %v414 = vstv %s413
        %v415 = vadd.f32 %v412, %v414
        %v416 = vxor.u32 %v415, 2147483648
        %v417 = vmul.f32 %v416, 1.442695
        %v418 = vpow.pop %v417
        %v419 = vadd.f32 %v418, 1.0
        %v420 = vrcp.pop %v419
        %v421 = vmul.f32 %v419, %v420
        %v422 = vsub.f32 1.0, %v421
        %v423 = vmul.f32 %v420, %v422
        %v424 = vadd.f32 %v420, %v423
        %vm425 = vweird.f32 %v419
        %vm426 = vweird.f32 %v420
        %vm427 = vmor %vm425, %vm426
        %v428 = vsel %vm427, %v420, %v424
        %v429 = vand.u32 2147483647, %v419
        %vm430 = vcmp.eq.f32.partialorder %v429, 8.507059e+37
        %v431 = vand.u32 %v419, 2147483648
        %v432 = vor.u32 1.1754944e-38, %v431
        %v433 = vsel %vm430, %v432, %v428
        %v434 = vmul.f32 1.0, %v433
        %v435 = vmul.f32 %v335, %v434
        %436 = vst [vmem:[%s317] sm:$0xf] %v435
        %s437 = sand.u32 %s205, 1
        %s438 = scalar_lea.sflag [#allocation4], %s437
        %s439 = sand.u32 %s205, 1
        %s440 = smul.addr %s439, 4
        %s441 = scalar_lea.vmem [#allocation3], %s440
        // Predicated region
        $region49: #{tpu_custom_call.1} parent=47 // pred_check
          %p442 = pneg %p215
        $region50: #{tpu_custom_call.1} parent=47 // pred_check_branch
          %444 = sbr.rel (%p442) target = $region52
        $region51: #{tpu_custom_call.1} parent=47 // pred_region
          %446 = vsyncadd %s438, 0
          %s447 = smul.addr %s26, 2
          %s448 = sadd.s32 %s27, %s447
          %s449 = smul.addr %s448, 4
          %s450 = scalar_lea.hbm %s7, %s449
          %s452 = sshll.u32 %s441, 4
          %s453 = int_to_ptr.vmem [resolvable:$true] %s452
          %s454 = sshll.u32 %s450, 4
          %s455 = int_to_ptr.hbm [resolvable:$true] %s454
          %457 = dma.vmem_to_hbm [thread:$0]  %s453, 64, %s455, %s438
        $region52: #{tpu_custom_call.1} parent=47 // pred_fallthru
          _
      $region48: #{tpu_custom_call.1} parent=5 // pred_fallthru
        _
      %p458 = scmp.le.s32.totalorder 2, %s17
      // Predicated region
      $region53: #{tpu_custom_call.1} parent=5 // pred_check
        %p459 = pneg %p458
      $region54: #{tpu_custom_call.1} parent=5 // pred_check_branch
        %461 = sbr.rel (%p459) target = $region56
      $region55: #{tpu_custom_call.1} parent=5 // pred_region
        %s462 = ssub.s32 %s17, 2
        // Predicated region
        $region57: #{tpu_custom_call.1} parent=55 // pred_check
          %p463 = pneg %p221
        $region58: #{tpu_custom_call.1} parent=55 // pred_check_branch
          %465 = sbr.rel (%p463) target = $region60
        $region59: #{tpu_custom_call.1} parent=55 // pred_region
          %s466 = sand.u32 %s206, 1
          %s467 = scalar_lea.sflag [#allocation4], %s466
          %s468 = sand.u32 %s206, 1
          %s469 = smul.addr %s468, 4
          %s470 = scalar_lea.vmem [#allocation3], %s469
          %472 = dma.done %s467, 64
        $region60: #{tpu_custom_call.1} parent=55 // pred_fallthru
          _
      $region56: #{tpu_custom_call.1} parent=5 // pred_fallthru
        _
    $region6: #{tpu_custom_call.1} parent=1 // loop_footer
      %s21 = sadd.s32 1, %s17
    $region7: #{tpu_custom_call.1} parent=1 // loop_footer_branch
      %16 = sbr.rel target = $region3
    $region8: #{tpu_custom_call.1} parent=1 // loop_exit
      _
    %473 = vsyncpa [#allocation4], 1
    %s474 = scalar_lea.sflag [#allocation4], 1
    %475 = vsyncpa %s474, 1

</llo_original>
